<compile_context>
chip_gen: v6e
topology: v6e:2x2x1
jax: 0.10.0
libtpu: 0.0.40
codegen_flags: <defaults>
</compile_context>

<pallas_src>
import functools

import jax
import jax.numpy as jnp
import numpy as np
from jax.experimental import pallas as pl
from jax.experimental.pallas import tpu as pltpu


# ---------------------------------------------------------------------------
# Kernel 1: fused cross-entropies + KLDiv('mean'), row-tiled, parallel grid
# ---------------------------------------------------------------------------
def _fused_cls_kl_kernel(y_ref, pred_sty_ref, pred_cont_ref, stypred_cont_ref,
                         stylabels_ref, out_ref, *, n_rows, row_tile, needs_mask):
    if needs_mask:
        i = pl.program_id(0)
        row_ids = i * row_tile + jax.lax.broadcasted_iota(jnp.int32, (row_tile, 1), 0)
        valid = row_ids < n_rows                           # ragged final tile mask

    y = y_ref[...]                                         # [T, 1] int32

    def log_softmax(z):
        zm = z - jnp.max(z, axis=-1, keepdims=True)
        return zm - jnp.log(jnp.sum(jnp.exp(zm), axis=-1, keepdims=True))

    def ce_partial(logits_ref):
        # matches F.cross_entropy(pred + 1e-06, y): sum of NLL over this tile's rows
        logits = logits_ref[...].astype(jnp.float32) + 1e-6
        logp = log_softmax(logits)                         # [T, C]
        cls = jax.lax.broadcasted_iota(jnp.int32, logp.shape, 1)
        picked = jnp.sum(jnp.where(cls == y, logp, 0.0), axis=-1, keepdims=True)
        if needs_mask:
            picked = jnp.where(valid, picked, 0.0)
        return -jnp.sum(picked)

    ce_sty = ce_partial(pred_sty_ref)
    ce_cont = ce_partial(pred_cont_ref)

    # KLDivLoss(reduction='mean'): target = softmax(stylabels), input = log_softmax(stypred_cont)
    sl = stylabels_ref[...].astype(jnp.float32)
    zm = sl - jnp.max(sl, axis=-1, keepdims=True)
    e = jnp.exp(zm)
    s = jnp.sum(e, axis=-1, keepdims=True)
    t = e / s
    log_t = zm - jnp.log(s)
    log_q = log_softmax(stypred_cont_ref[...].astype(jnp.float32))
    kl_elem = t * (log_t - log_q)
    if needs_mask:
        kl_elem = jnp.where(valid, kl_elem, 0.0)
    kl = jnp.sum(kl_elem)

    # lane-dense (1, 8, 128) partial-sum slab: lanes 0/1/2 hold the three partials
    lane = jax.lax.broadcasted_iota(jnp.int32, (1, 8, 128), 2)
    out_ref[...] = (jnp.where(lane == 0, ce_sty, 0.0)
                    + jnp.where(lane == 1, ce_cont, 0.0)
                    + jnp.where(lane == 2, kl, 0.0))


# ---------------------------------------------------------------------------
# Kernel 2: Multilevel_Contrastive_Loss (triple loss), single pass
# ---------------------------------------------------------------------------
def _triple_kernel(x_ref, pdcol_ref, ndcol_ref, pdrow_ref, ndrow_ref,
                   idxp_ref, idxn_ref, out_ref, *, domain_num, margin):
    x = x_ref[...].astype(jnp.float32)                     # [N, C]
    half_p = pdcol_ref.shape[0]
    half_n = ndcol_ref.shape[0]
    posi = x[:half_p]
    nega = x[half_p:]

    p_d_col = pdcol_ref[...]                               # [half_p, 1] int32
    n_d_col = ndcol_ref[...]                               # [half_n, 1]
    p_d_row = pdrow_ref[...]                               # [1, half_p]
    n_d_row = ndrow_ref[...]                               # [1, half_n]
    idx_p = idxp_ref[...]                                  # [half_p, 1]
    idx_n = idxn_ref[...]                                  # [half_n, 1]

    def softmax_and_log(z):
        zm = z - jnp.max(z, axis=-1, keepdims=True)
        e = jnp.exp(zm)
        s = jnp.sum(e, axis=-1, keepdims=True)
        return e / s, zm - jnp.log(s)

    def log_softmax(z):
        zm = z - jnp.max(z, axis=-1, keepdims=True)
        return zm - jnp.log(jnp.sum(jnp.exp(zm), axis=-1, keepdims=True))

    # torch_scatter.scatter_mean(..., dim_size=domain_num) as a one-hot MXU matmul
    def domain_mean(vals, d_row, half):
        oh_t = (jax.lax.broadcasted_iota(jnp.int32, (domain_num, half), 0)
                == d_row).astype(jnp.float32)              # [dn, half]
        sums = jnp.dot(oh_t, vals, preferred_element_type=jnp.float32)   # [dn, C]
        cnt = jnp.sum(oh_t, axis=-1, keepdims=True)                      # [dn, 1]
        return sums / jnp.maximum(cnt, 1.0)                # empty group -> 0 (as torch_scatter)

    anc_p, log_anc_p = softmax_and_log(domain_mean(posi, p_d_row, half_p))
    anc_n, log_anc_n = softmax_and_log(domain_mean(nega, n_d_row, half_n))

    log_posi = log_softmax(posi)                           # [half_p, C]
    log_nega = log_softmax(nega)                           # [half_n, C]

    # anchor row gather by domain id (exact one-hot row-select matmuls)
    def gather_rows(anchor, log_anchor, ids_col, half):
        oh = (jax.lax.broadcasted_iota(jnp.int32, (half, domain_num), 1)
              == ids_col).astype(jnp.float32)              # [half, dn]
        return (jnp.dot(oh, anchor, preferred_element_type=jnp.float32),
                jnp.dot(oh, log_anchor, preferred_element_type=jnp.float32))

    def kl_batchmean(log_q, t, log_t):
        return jnp.sum(t * (log_t - log_q)) / log_q.shape[0]

    t_ps, lt_ps = gather_rows(anc_p, log_anc_p, p_d_col, half_p)
    t_ns, lt_ns = gather_rows(anc_n, log_anc_n, n_d_col, half_n)
    kl_p_same = kl_batchmean(log_posi, t_ps, lt_ps)
    kl_n_same = kl_batchmean(log_nega, t_ns, lt_ns)

    if domain_num <= 2:
        loss_c = kl_p_same + kl_n_same
    else:
        t_pr, lt_pr = gather_rows(anc_p, log_anc_p, idx_p, half_p)
        t_nr, lt_nr = gather_rows(anc_n, log_anc_n, idx_n, half_n)
        kl_p_rand = kl_batchmean(log_posi, t_pr, lt_pr)
        kl_n_rand = kl_batchmean(log_nega, t_nr, lt_nr)
        loss_c = (jnp.maximum(margin + kl_p_same - kl_p_rand, 0.0)
                  + jnp.maximum(margin + kl_n_same - kl_n_rand, 0.0))

    pp_mean = jnp.mean(anc_p, axis=0, keepdims=True)       # [1, C]
    nn_mean = jnp.mean(anc_n, axis=0, keepdims=True)
    log_pp = jnp.log(pp_mean)
    log_nn = jnp.log(nn_mean)
    dnum = float(domain_num)
    kl_anc_p = jnp.sum(pp_mean * (log_pp - log_anc_p)) / dnum
    kl_anc_n = jnp.sum(nn_mean * (log_nn - log_anc_n)) / dnum
    kl_mean_pn = jnp.sum(nn_mean * (log_nn - log_pp))
    kl_mean_np = jnp.sum(pp_mean * (log_pp - log_nn))
    loss_d = jnp.maximum(margin + kl_anc_p + kl_anc_n
                         - (kl_mean_pn + kl_mean_np) * 0.5, 0.0)

    out_ref[0] = (loss_c + loss_d) * 0.5


# ---------------------------------------------------------------------------
# Host-side helpers / wrappers
# ---------------------------------------------------------------------------
def make_contrastive_neg_indices(D, domain_num, key):
    """Reproduces torch.fmod(D_half + torch.randint(1, domain_num-1, ...), domain_num)."""
    n = D.shape[0]
    half_p = -(-n // 2)
    half_n = n - half_p
    if domain_num > 2:
        kp, kn = jax.random.split(key)
        off_p = jax.random.randint(kp, (half_p,), 1, domain_num - 1, dtype=jnp.int32)
        off_n = jax.random.randint(kn, (half_n,), 1, domain_num - 1, dtype=jnp.int32)
    else:
        off_p = jnp.zeros((half_p,), jnp.int32)
        off_n = jnp.zeros((half_n,), jnp.int32)
    idx_p = jnp.mod(D[:half_p].astype(jnp.int32) + off_p, domain_num)
    idx_n = jnp.mod(D[half_p:].astype(jnp.int32) + off_n, domain_num)
    return idx_p, idx_n


def loss_function_wodecoder_pallas(preds, targets, margin=0.5, domain_num=4,
                                   original=True, neg_indices=None, rng_key=None,
                                   row_tile=256):
    stypred_cont, stypred_sty, pred_cont, pred_sty, x_rec, cont, sty = preds
    stylabels, y, x, D = targets
    n, c = pred_sty.shape

    # --- kernel 1: row-tiled fused CE + CE + KL ---------------------------------
    # row_tile sized well under the 32 MiB scoped-VMEM default (fits v7x's 64 MiB VMEM
    # with double buffering of 4 logit tiles); multiple of 8 (f32 sublane packing).
    row_tile = int(row_tile)
    row_tile = max(8, row_tile - row_tile % 8)
    if row_tile >= n:
        row_tile = n
    num_tiles = pl.cdiv(n, row_tile)
    needs_mask = (n % row_tile) != 0

    y2d = y.astype(jnp.int32).reshape(n, 1)

    kernel1 = functools.partial(_fused_cls_kl_kernel, n_rows=n, row_tile=row_tile,
                                needs_mask=needs_mask)
    partials = pl.pallas_call(
        kernel1,
        out_shape=jax.ShapeDtypeStruct((num_tiles, 8, 128), jnp.float32),
        grid=(num_tiles,),
        in_specs=[
            pl.BlockSpec((row_tile, 1), lambda i: (i, 0)),
            pl.BlockSpec((row_tile, c), lambda i: (i, 0)),
            pl.BlockSpec((row_tile, c), lambda i: (i, 0)),
            pl.BlockSpec((row_tile, c), lambda i: (i, 0)),
            pl.BlockSpec((row_tile, c), lambda i: (i, 0)),
        ],
        out_specs=pl.BlockSpec((1, 8, 128), lambda i: (i, 0, 0)),
        compiler_params=pltpu.CompilerParams(
            dimension_semantics=("parallel",),
            vmem_limit_bytes=32 * 1024 * 1024),
    )(y2d, pred_sty, pred_cont, stypred_cont, stylabels)

    sums = jnp.sum(partials[:, 0, :], axis=0)              # (128,)
    clsloss_sty = sums[0] / n
    clsloss_cont = sums[1] / n
    styloss_cont = sums[2] / (n * c)                       # KLDivLoss 'mean' divides by numel

    # --- kernel 2: triple loss ---------------------------------------------------
    if original:
        half_p = -(-n // 2)
        if neg_indices is not None:
            idx_p, idx_n = neg_indices
        else:
            key = rng_key if rng_key is not None else jax.random.PRNGKey(0)
            idx_p, idx_n = make_contrastive_neg_indices(D, domain_num, key)

        d32 = D.astype(jnp.int32)
        pd_col = d32[:half_p].reshape(half_p, 1)
        nd_col = d32[half_p:].reshape(n - half_p, 1)
        pd_row = d32[:half_p].reshape(1, half_p)
        nd_row = d32[half_p:].reshape(1, n - half_p)
        idxp_col = idx_p.astype(jnp.int32).reshape(half_p, 1)
        idxn_col = idx_n.astype(jnp.int32).reshape(n - half_p, 1)

        kernel2 = functools.partial(_triple_kernel, domain_num=int(domain_num),
                                    margin=float(margin))
        # TODO(synk): for very large batches this single-block kernel would need a
        # two-pass row-tiled variant (scatter stats pass + KL pass).
        styloss_sty = pl.pallas_call(
            kernel2,
            out_shape=jax.ShapeDtypeStruct((1,), jnp.float32),
            in_specs=[pl.BlockSpec(memory_space=pltpu.MemorySpace.VMEM)] * 7,
            out_specs=pl.BlockSpec(memory_space=pltpu.MemorySpace.SMEM),
            compiler_params=pltpu.CompilerParams(vmem_limit_bytes=32 * 1024 * 1024),
        )(stypred_sty, pd_col, nd_col, pd_row, nd_row, idxp_col, idxn_col)[0]
    else:
        styloss_sty = jnp.zeros((), jnp.float32)

    loss_rec = jnp.zeros((), jnp.float32)   # Reconstruction_Loss never invoked in this forward
    loss = styloss_cont + styloss_sty + (clsloss_sty + clsloss_cont) * 0.5 + loss_rec
    return loss, styloss_cont, styloss_sty, clsloss_cont, clsloss_sty, loss_rec


# ---------------------------------------------------------------------------
# Pure-JAX reference (mirrors the PyTorch module) for a correctness check
# ---------------------------------------------------------------------------
def _reference_triple(inp, D, idx_p, idx_n, margin, domain_num):
    n = inp.shape[0]
    half_p = -(-n // 2)
    posi, nega = inp[:half_p], inp[half_p:]
    p_d, n_d = D[:half_p], D[half_p:]

    def smean(v, d):
        oh = jax.nn.one_hot(d, domain_num, dtype=jnp.float32)
        s = oh.T @ v
        cnt = oh.sum(0)[:, None]
        return s / jnp.maximum(cnt, 1.0)

    pa = jax.nn.softmax(smean(posi, p_d), axis=-1)
    na = jax.nn.softmax(smean(nega, n_d), axis=-1)
    lp = jax.nn.log_softmax(posi, axis=-1)
    ln = jax.nn.log_softmax(nega, axis=-1)

    def kl_bm(log_q, t):
        return jnp.sum(t * (jnp.log(t) - log_q)) / log_q.shape[0]

    if domain_num <= 2:
        loss_c = kl_bm(lp, pa[p_d]) + kl_bm(ln, na[n_d])
    else:
        loss_c = (jnp.maximum(margin + kl_bm(lp, pa[p_d]) - kl_bm(lp, pa[idx_p]), 0.0)
                  + jnp.maximum(margin + kl_bm(ln, na[n_d]) - kl_bm(ln, na[idx_n]), 0.0))

    pp = pa.mean(0, keepdims=True)
    nn_ = na.mean(0, keepdims=True)
    kl_a_p = kl_bm(jnp.log(pa), pp)
    kl_a_n = kl_bm(jnp.log(na), nn_)
    kl_m_pn = jnp.sum(nn_ * (jnp.log(nn_) - jnp.log(pp)))
    kl_m_np = jnp.sum(pp * (jnp.log(pp) - jnp.log(nn_)))
    loss_d = jnp.maximum(margin + kl_a_p + kl_a_n - (kl_m_pn + kl_m_np) * 0.5, 0.0)
    return (loss_c + loss_d) * 0.5


def _reference_loss(preds, targets, margin, domain_num, idx_p, idx_n, original=True):
    stypred_cont, stypred_sty, pred_cont, pred_sty, x_rec, cont, sty = preds
    stylabels, y, x, D = targets

    def ce(logits, labels):
        logp = jax.nn.log_softmax(logits + 1e-6, axis=-1)
        picked = jnp.take_along_axis(logp, labels.astype(jnp.int32)[:, None], axis=-1)
        return -jnp.mean(picked)

    clsloss_sty = ce(pred_sty, y)
    clsloss_cont = ce(pred_cont, y)

    t = jax.nn.softmax(stylabels - jnp.max(stylabels, axis=-1, keepdims=True), axis=-1)
    log_q = jax.nn.log_softmax(stypred_cont - jnp.max(stypred_cont, axis=-1, keepdims=True),
                               axis=-1)
    styloss_cont = jnp.mean(t * (jnp.log(t) - log_q))      # KLDivLoss 'mean'

    if original:
        styloss_sty = _reference_triple(stypred_sty, D, idx_p, idx_n, margin, domain_num)
    else:
        styloss_sty = jnp.zeros((), jnp.float32)
    loss_rec = jnp.zeros((), jnp.float32)
    loss = styloss_cont + styloss_sty + (clsloss_sty + clsloss_cont) * 0.5 + loss_rec
    return loss, styloss_cont, styloss_sty, clsloss_cont, clsloss_sty, loss_rec


# ---------------------------------------------------------------------------
if __name__ == "__main__":
    key = jax.random.PRNGKey(0)
    N, C = 16, 128          # batch, classes (lane-dense class dim)
    L, F = 8, 32            # seq / feature dims of the unused reconstruction tensors
    domain_num, margin = 4, 0.5

    ks = jax.random.split(key, 12)
    stypred_cont = jax.random.normal(ks[0], (N, C), jnp.float32)
    stypred_sty = jax.random.normal(ks[1], (N, C), jnp.float32)
    pred_cont = jax.random.normal(ks[2], (N, C), jnp.float32)
    pred_sty = jax.random.normal(ks[3], (N, C), jnp.float32)
    x_rec = jax.random.normal(ks[4], (N, L, F), jnp.float32)   # unused by this forward
    cont = jax.random.normal(ks[5], (N, L, F), jnp.float32)    # unused
    sty = jax.random.normal(ks[6], (N, L, F), jnp.float32)     # unused
    stylabels = jax.random.normal(ks[7], (N, C), jnp.float32)
    y = jax.random.randint(ks[8], (N,), 0, C, jnp.int32)
    x = jax.random.normal(ks[9], (N, L, F), jnp.float32)       # unused
    D = jax.random.randint(ks[10], (N,), 0, domain_num, jnp.int32)

    # deterministic replacement for the in-module torch.randint
    idx_p, idx_n = make_contrastive_neg_indices(D, domain_num, ks[11])

    preds = [stypred_cont, stypred_sty, pred_cont, pred_sty, x_rec, cont, sty]
    targets = [stylabels, y, x, D]

    out = loss_function_wodecoder_pallas(preds, targets, margin=margin,
                                         domain_num=domain_num, original=True,
                                         neg_indices=(idx_p, idx_n), row_tile=8)
    out = jax.block_until_ready(out)

    ref = _reference_loss(preds, targets, margin, domain_num, idx_p, idx_n, original=True)
    for got, want in zip(out, ref):
        np.testing.assert_allclose(np.asarray(got), np.asarray(want),
                                   rtol=1e-4, atol=1e-5)

    print("KERNEL_OK")
</pallas_src>

<mosaic_0001>
module attributes {stable_mosaic.version = 11 : i64} {
  func.func @_fused_cls_kl_kernel(%arg0: i32, %arg1: memref<8x1xi32, #tpu.memory_space<vmem>>, %arg2: memref<8x128xf32, #tpu.memory_space<vmem>>, %arg3: memref<8x128xf32, #tpu.memory_space<vmem>>, %arg4: memref<8x128xf32, #tpu.memory_space<vmem>>, %arg5: memref<8x128xf32, #tpu.memory_space<vmem>>, %arg6: memref<1x8x128xf32, #tpu.memory_space<vmem>>) attributes {dimension_semantics = [#tpu.dimension_semantics<parallel>], iteration_bounds = array<i64: 2>, scalar_prefetch = 0 : i64, scratch_operands = 0 : i64, tpu.core_type = #tpu.core_type<tc>, window_params = [{transform_indices = @transform_0, window_bounds = array<i64: 8, 1>}, {transform_indices = @transform_1, window_bounds = array<i64: 8, 128>}, {transform_indices = @transform_2, window_bounds = array<i64: 8, 128>}, {transform_indices = @transform_3, window_bounds = array<i64: 8, 128>}, {transform_indices = @transform_4, window_bounds = array<i64: 8, 128>}, {transform_indices = @transform_5, window_bounds = array<i64: 1, 8, 128>}]} {
    %c0 = arith.constant 0 : index
    %c0_0 = arith.constant 0 : index
    %0 = vector.load %arg1[%c0, %c0_0] : memref<8x1xi32, #tpu.memory_space<vmem>>, vector<8x1xi32>
    %c0_1 = arith.constant 0 : index
    %c0_2 = arith.constant 0 : index
    %1 = vector.load %arg2[%c0_1, %c0_2] : memref<8x128xf32, #tpu.memory_space<vmem>>, vector<8x128xf32>
    %cst = arith.constant 9.99999997E-7 : f32
    %2 = vector.broadcast %cst : f32 to vector<8x128xf32>
    %3 = arith.addf %1, %2 : vector<8x128xf32>
    %cst_3 = arith.constant dense<0xFF800000> : vector<8xf32>
    %4 = vector.multi_reduction <maximumf>, %3, %cst_3 [1] : vector<8x128xf32> to vector<8xf32>
    %5 = vector.shape_cast %4 : vector<8xf32> to vector<8x1xf32>
    %6 = vector.broadcast %5 : vector<8x1xf32> to vector<8x128xf32>
    %7 = arith.subf %3, %6 : vector<8x128xf32>
    %8 = math.exp %7 : vector<8x128xf32>
    %cst_4 = arith.constant dense<0.000000e+00> : vector<8xf32>
    %9 = vector.multi_reduction <add>, %8, %cst_4 [1] : vector<8x128xf32> to vector<8xf32>
    %10 = vector.shape_cast %9 : vector<8xf32> to vector<8x1xf32>
    %11 = math.log %10 : vector<8x1xf32>
    %12 = vector.broadcast %11 : vector<8x1xf32> to vector<8x128xf32>
    %13 = arith.subf %7, %12 : vector<8x128xf32>
    %14 = tpu.iota {dimensions = array<i32: 1>} : vector<8x128xi32>
    %15 = vector.broadcast %0 : vector<8x1xi32> to vector<8x128xi32>
    %16 = arith.cmpi eq, %14, %15 : vector<8x128xi32>
    %cst_5 = arith.constant 0.000000e+00 : f32
    %17 = vector.broadcast %cst_5 : f32 to vector<8x128xf32>
    %18 = arith.select %16, %13, %17 : vector<8x128xi1>, vector<8x128xf32>
    %cst_6 = arith.constant dense<0.000000e+00> : vector<8xf32>
    %19 = vector.multi_reduction <add>, %18, %cst_6 [1] : vector<8x128xf32> to vector<8xf32>
    %20 = vector.shape_cast %19 : vector<8xf32> to vector<8x1xf32>
    %21 = vector.shape_cast %20 : vector<8x1xf32> to vector<1x8x1xf32>
    %cst_7 = arith.constant dense<0.000000e+00> : vector<1xf32>
    %22 = vector.multi_reduction <add>, %21, %cst_7 [1, 2] : vector<1x8x1xf32> to vector<1xf32>
    %23 = vector.shape_cast %22 : vector<1xf32> to vector<1x1x1xf32>
    %24 = vector.extract %23[0, 0, 0] : f32 from vector<1x1x1xf32>
    %cst_8 = arith.constant 0.000000e+00 : f32
    %25 = arith.subf %cst_8, %24 : f32
    %c0_9 = arith.constant 0 : index
    %c0_10 = arith.constant 0 : index
    %26 = vector.load %arg3[%c0_9, %c0_10] : memref<8x128xf32, #tpu.memory_space<vmem>>, vector<8x128xf32>
    %cst_11 = arith.constant 9.99999997E-7 : f32
    %27 = vector.broadcast %cst_11 : f32 to vector<8x128xf32>
    %28 = arith.addf %26, %27 : vector<8x128xf32>
    %cst_12 = arith.constant dense<0xFF800000> : vector<8xf32>
    %29 = vector.multi_reduction <maximumf>, %28, %cst_12 [1] : vector<8x128xf32> to vector<8xf32>
    %30 = vector.shape_cast %29 : vector<8xf32> to vector<8x1xf32>
    %31 = vector.broadcast %30 : vector<8x1xf32> to vector<8x128xf32>
    %32 = arith.subf %28, %31 : vector<8x128xf32>
    %33 = math.exp %32 : vector<8x128xf32>
    %cst_13 = arith.constant dense<0.000000e+00> : vector<8xf32>
    %34 = vector.multi_reduction <add>, %33, %cst_13 [1] : vector<8x128xf32> to vector<8xf32>
    %35 = vector.shape_cast %34 : vector<8xf32> to vector<8x1xf32>
    %36 = math.log %35 : vector<8x1xf32>
    %37 = vector.broadcast %36 : vector<8x1xf32> to vector<8x128xf32>
    %38 = arith.subf %32, %37 : vector<8x128xf32>
    %39 = tpu.iota {dimensions = array<i32: 1>} : vector<8x128xi32>
    %40 = vector.broadcast %0 : vector<8x1xi32> to vector<8x128xi32>
    %41 = arith.cmpi eq, %39, %40 : vector<8x128xi32>
    %cst_14 = arith.constant 0.000000e+00 : f32
    %42 = vector.broadcast %cst_14 : f32 to vector<8x128xf32>
    %43 = arith.select %41, %38, %42 : vector<8x128xi1>, vector<8x128xf32>
    %cst_15 = arith.constant dense<0.000000e+00> : vector<8xf32>
    %44 = vector.multi_reduction <add>, %43, %cst_15 [1] : vector<8x128xf32> to vector<8xf32>
    %45 = vector.shape_cast %44 : vector<8xf32> to vector<8x1xf32>
    %46 = vector.shape_cast %45 : vector<8x1xf32> to vector<1x8x1xf32>
    %cst_16 = arith.constant dense<0.000000e+00> : vector<1xf32>
    %47 = vector.multi_reduction <add>, %46, %cst_16 [1, 2] : vector<1x8x1xf32> to vector<1xf32>
    %48 = vector.shape_cast %47 : vector<1xf32> to vector<1x1x1xf32>
    %49 = vector.extract %48[0, 0, 0] : f32 from vector<1x1x1xf32>
    %cst_17 = arith.constant 0.000000e+00 : f32
    %50 = arith.subf %cst_17, %49 : f32
    %c0_18 = arith.constant 0 : index
    %c0_19 = arith.constant 0 : index
    %51 = vector.load %arg5[%c0_18, %c0_19] : memref<8x128xf32, #tpu.memory_space<vmem>>, vector<8x128xf32>
    %cst_20 = arith.constant dense<0xFF800000> : vector<8xf32>
    %52 = vector.multi_reduction <maximumf>, %51, %cst_20 [1] : vector<8x128xf32> to vector<8xf32>
    %53 = vector.shape_cast %52 : vector<8xf32> to vector<8x1xf32>
    %54 = vector.broadcast %53 : vector<8x1xf32> to vector<8x128xf32>
    %55 = arith.subf %51, %54 : vector<8x128xf32>
    %56 = math.exp %55 : vector<8x128xf32>
    %cst_21 = arith.constant dense<0.000000e+00> : vector<8xf32>
    %57 = vector.multi_reduction <add>, %56, %cst_21 [1] : vector<8x128xf32> to vector<8xf32>
    %58 = vector.shape_cast %57 : vector<8xf32> to vector<8x1xf32>
    %59 = vector.broadcast %58 : vector<8x1xf32> to vector<8x128xf32>
    %60 = arith.divf %56, %59 : vector<8x128xf32>
    %61 = math.log %58 : vector<8x1xf32>
    %62 = vector.broadcast %61 : vector<8x1xf32> to vector<8x128xf32>
    %63 = arith.subf %55, %62 : vector<8x128xf32>
    %c0_22 = arith.constant 0 : index
    %c0_23 = arith.constant 0 : index
    %64 = vector.load %arg4[%c0_22, %c0_23] : memref<8x128xf32, #tpu.memory_space<vmem>>, vector<8x128xf32>
    %cst_24 = arith.constant dense<0xFF800000> : vector<8xf32>
    %65 = vector.multi_reduction <maximumf>, %64, %cst_24 [1] : vector<8x128xf32> to vector<8xf32>
    %66 = vector.shape_cast %65 : vector<8xf32> to vector<8x1xf32>
    %67 = vector.broadcast %66 : vector<8x1xf32> to vector<8x128xf32>
    %68 = arith.subf %64, %67 : vector<8x128xf32>
    %69 = math.exp %68 : vector<8x128xf32>
    %cst_25 = arith.constant dense<0.000000e+00> : vector<8xf32>
    %70 = vector.multi_reduction <add>, %69, %cst_25 [1] : vector<8x128xf32> to vector<8xf32>
    %71 = vector.shape_cast %70 : vector<8xf32> to vector<8x1xf32>
    %72 = math.log %71 : vector<8x1xf32>
    %73 = vector.broadcast %72 : vector<8x1xf32> to vector<8x128xf32>
    %74 = arith.subf %68, %73 : vector<8x128xf32>
    %75 = arith.subf %63, %74 : vector<8x128xf32>
    %76 = arith.mulf %60, %75 : vector<8x128xf32>
    %77 = vector.shape_cast %76 : vector<8x128xf32> to vector<1x8x128xf32>
    %cst_26 = arith.constant dense<0.000000e+00> : vector<1xf32>
    %78 = vector.multi_reduction <add>, %77, %cst_26 [1, 2] : vector<1x8x128xf32> to vector<1xf32>
    %79 = vector.shape_cast %78 : vector<1xf32> to vector<1x1x1xf32>
    %80 = vector.extract %79[0, 0, 0] : f32 from vector<1x1x1xf32>
    %81 = tpu.iota {dimensions = array<i32: 2>} : vector<1x8x128xi32>
    %c0_i32 = arith.constant 0 : i32
    %82 = vector.broadcast %c0_i32 : i32 to vector<1x8x128xi32>
    %83 = arith.cmpi eq, %81, %82 : vector<1x8x128xi32>
    %cst_27 = arith.constant 0.000000e+00 : f32
    %84 = vector.broadcast %25 : f32 to vector<1x8x128xf32>
    %85 = vector.broadcast %cst_27 : f32 to vector<1x8x128xf32>
    %86 = arith.select %83, %84, %85 : vector<1x8x128xi1>, vector<1x8x128xf32>
    %c1_i32 = arith.constant 1 : i32
    %87 = vector.broadcast %c1_i32 : i32 to vector<1x8x128xi32>
    %88 = arith.cmpi eq, %81, %87 : vector<1x8x128xi32>
    %cst_28 = arith.constant 0.000000e+00 : f32
    %89 = vector.broadcast %50 : f32 to vector<1x8x128xf32>
    %90 = vector.broadcast %cst_28 : f32 to vector<1x8x128xf32>
    %91 = arith.select %88, %89, %90 : vector<1x8x128xi1>, vector<1x8x128xf32>
    %92 = arith.addf %86, %91 : vector<1x8x128xf32>
    %c2_i32 = arith.constant 2 : i32
    %93 = vector.broadcast %c2_i32 : i32 to vector<1x8x128xi32>
    %94 = arith.cmpi eq, %81, %93 : vector<1x8x128xi32>
    %cst_29 = arith.constant 0.000000e+00 : f32
    %95 = vector.broadcast %80 : f32 to vector<1x8x128xf32>
    %96 = vector.broadcast %cst_29 : f32 to vector<1x8x128xf32>
    %97 = arith.select %94, %95, %96 : vector<1x8x128xi1>, vector<1x8x128xf32>
    %98 = arith.addf %92, %97 : vector<1x8x128xf32>
    %c0_30 = arith.constant 0 : index
    %c0_31 = arith.constant 0 : index
    %c0_32 = arith.constant 0 : index
    %99 = vector.load %arg6[%c0_30, %c0_31, %c0_32] : memref<1x8x128xf32, #tpu.memory_space<vmem>>, vector<1x8x128xf32>
    tpu.vector_store %arg6[%c0_30, %c0_31, %c0_32], %98 {strides = array<i32>} : memref<1x8x128xf32, #tpu.memory_space<vmem>>, vector<1x8x128xf32>,
    return
  }
  func.func @transform_0(%arg0: i32) -> (i32, i32) {
    %c0_i32 = arith.constant 0 : i32
    %c0_i32_0 = arith.constant 0 : i32
    return %arg0, %c0_i32 : i32, i32
  }
  func.func @transform_1(%arg0: i32) -> (i32, i32) {
    %c0_i32 = arith.constant 0 : i32
    %c0_i32_0 = arith.constant 0 : i32
    return %arg0, %c0_i32 : i32, i32
  }
  func.func @transform_2(%arg0: i32) -> (i32, i32) {
    %c0_i32 = arith.constant 0 : i32
    %c0_i32_0 = arith.constant 0 : i32
    return %arg0, %c0_i32 : i32, i32
  }
  func.func @transform_3(%arg0: i32) -> (i32, i32) {
    %c0_i32 = arith.constant 0 : i32
    %c0_i32_0 = arith.constant 0 : i32
    return %arg0, %c0_i32 : i32, i32
  }
  func.func @transform_4(%arg0: i32) -> (i32, i32) {
    %c0_i32 = arith.constant 0 : i32
    %c0_i32_0 = arith.constant 0 : i32
    return %arg0, %c0_i32 : i32, i32
  }
  func.func @transform_5(%arg0: i32) -> (i32, i32, i32) {
    %c0_i32 = arith.constant 0 : i32
    %c0_i32_0 = arith.constant 0 : i32
    %c0_i32_1 = arith.constant 0 : i32
    return %arg0, %c0_i32, %c0_i32_0 : i32, i32, i32
  }
}

</mosaic_0001>

<llo_original>
// kernel: tpu_custom_call.1
$region0: #{tpu_custom_call.1}
  #allocation0 [shape = 'u32[]', space=smem, size = 0x4, offset = 0x4, fixed_abs, tag = 'smem constant byte address 0x4 - core index']
  #allocation1 [shape = 'u32[144,128]{1,0:T(1,128)}', space=vmem, size = 0x12000, scoped, tag = 'internal scratch']
  %s0 = inlined_call_operand.vmem [shape: s32[16,1], index: 0, kind: input, shape index: {}]
  %s1 = inlined_call_operand.vmem [shape: f32[16,128], index: 1, kind: input, shape index: {}]
  %s2 = inlined_call_operand.hbm [shape: f32[16,128], index: 2, kind: input, shape index: {}]
  %s3 = inlined_call_operand.hbm [shape: f32[16,128], index: 3, kind: input, shape index: {}]
  %s4 = inlined_call_operand.hbm [shape: f32[16,128], index: 4, kind: input, shape index: {}]
  %s5 = inlined_call_operand.hbm [shape: f32[2,8,128], index: 5, kind: output, shape index: {}]
  %s6 = sld [smem:[#allocation0]]
  $region65: #{tpu_custom_call.1} parent=0
    _
  %s8 = ssub.s32 1, %s6
  %s9 = scalar_select 0, %s8, %s6
  $region1: #{tpu_custom_call.1} parent=0
    #allocation2 [shape = 'u8[8192]{0}', space=vmem, size = 0x2000, scoped, tag = 'input window, operand 2']
    #allocation3 [shape = 's32[2]{0}', space=sflag, size = 0x8, scoped, tag = 'scoped memory for tpu_custom_call.1']
    #allocation4 [shape = 's32[2]{0}', space=sflag, size = 0x8, scoped, tag = 'scoped memory for tpu_custom_call.1']
    #allocation5 [shape = 'u8[8192]{0}', space=vmem, size = 0x2000, scoped, tag = 'input window, operand 3']
    #allocation6 [shape = 's32[2]{0}', space=sflag, size = 0x8, scoped, tag = 'scoped memory for tpu_custom_call.1']
    #allocation7 [shape = 'u8[8192]{0}', space=vmem, size = 0x2000, scoped, tag = 'input window, operand 4']
    #allocation8 [shape = 'u8[8192]{0}', space=vmem, size = 0x2000, scoped, tag = 'output window, operand 0']
    %10 = vsyncpa [#allocation3], 0
    %s11 = scalar_lea.sflag [#allocation3], 1
    %12 = vsyncpa %s11, 0
    %13 = vsyncpa [#allocation6], 0
    %s14 = scalar_lea.sflag [#allocation6], 1
    %15 = vsyncpa %s14, 0
    %16 = vsyncpa [#allocation4], 0
    %s17 = scalar_lea.sflag [#allocation4], 1
    %18 = vsyncpa %s17, 0
    loop: start=0, step=1, limit=4
    $region2: #{tpu_custom_call.1} parent=1 // loop_pre_header
      _
    $region3: #{tpu_custom_call.1} parent=1 // loop_header
      %s20 = sphi 0, %s24
      %p21 = scmp.ge.s32.totalorder %s20, 4
      %s30 = sphi 0, %s32
      %s33 = sphi 0, %s30
      %s34 = sphi 0, %s33
      %s50 = sphi 0, %s34
      %s56 = sphi 0, %s58
      %s59 = sphi 0, %s56
      %s60 = sphi 0, %s59
      %s76 = sphi 0, %s60
      %s82 = sphi 0, %s84
      %s85 = sphi 0, %s82
      %s86 = sphi 0, %s85
      %s102 = sphi 0, %s86
      %s108 = sphi 0, %s110
      %s111 = sphi 0, %s108
      %s112 = sphi 0, %s111
      %s128 = sphi 0, %s112
      %s134 = sphi 0, %s136
      %s137 = sphi 0, %s134
      %s138 = sphi 0, %s137
      %s154 = sphi 0, %s138
      %s160 = sphi 0, %s162
      %s163 = sphi 0, %s160
      %s164 = sphi 0, %s163
      %s180 = sphi 0, %s164
    $region4: #{tpu_custom_call.1} parent=1 // loop_header_branch
      %23 = sbr.rel (%p21) target = $region8
    $region5: #{tpu_custom_call.1} parent=1 // loop_body
      %s25 = ssub.s32 %s20, 1
      %s26 = ssub.s32 %s20, 2
      %s27 = sadd.s32 %s20, 1
      %s28 = ssub.s32 %s20, %s27
      %p29 = scmp.eq.s32.totalorder %s28, 0
      %s31 = sadd.s32 %s30, 1
      %s32 = scalar_select %p29, %s30, %s31
      %p35 = pneg %p29
      %p36 = scmp.eq.s32.totalorder %s20, 1
      %p37 = por %p35, %p36
      %p38 = scmp.ne.s32.totalorder %s30, %s33
      %p39 = scmp.eq.s32.totalorder %s20, 0
      %p40 = por %p38, %p39
      %p41 = scmp.ne.s32.totalorder %s30, %s33
      %p42 = scmp.eq.s32.totalorder %s25, 1
      %p43 = por %p41, %p42
      %p44 = scmp.ne.s32.totalorder %s33, %s34
      %p45 = scmp.eq.s32.totalorder %s25, 0
      %p46 = por %p44, %p45
      %p47 = scmp.ne.s32.totalorder %s33, %s34
      %p48 = scmp.eq.s32.totalorder %s26, 1
      %p49 = por %p47, %p48
      %p51 = scmp.ne.s32.totalorder %s34, %s50
      %p52 = scmp.eq.s32.totalorder %s26, 0
      %p53 = por %p51, %p52
      %s54 = ssub.s32 %s20, %s27
      %p55 = scmp.eq.s32.totalorder %s54, 0
      %s57 = sadd.s32 %s56, 1
      %s58 = scalar_select %p55, %s56, %s57
      %p61 = pneg %p55
      %p62 = scmp.eq.s32.totalorder %s20, 1
      %p63 = por %p61, %p62
      %p64 = scmp.ne.s32.totalorder %s56, %s59
      %p65 = scmp.eq.s32.totalorder %s20, 0
      %p66 = por %p64, %p65
      %p67 = scmp.ne.s32.totalorder %s56, %s59
      %p68 = scmp.eq.s32.totalorder %s25, 1
      %p69 = por %p67, %p68
      %p70 = scmp.ne.s32.totalorder %s59, %s60
      %p71 = scmp.eq.s32.totalorder %s25, 0
      %p72 = por %p70, %p71
      %p73 = scmp.ne.s32.totalorder %s59, %s60
      %p74 = scmp.eq.s32.totalorder %s26, 1
      %p75 = por %p73, %p74
      %p77 = scmp.ne.s32.totalorder %s60, %s76
      %p78 = scmp.eq.s32.totalorder %s26, 0
      %p79 = por %p77, %p78
      %s80 = ssub.s32 %s20, %s27
      %p81 = scmp.eq.s32.totalorder %s80, 0
      %s83 = sadd.s32 %s82, 1
      %s84 = scalar_select %p81, %s82, %s83
      %p87 = pneg %p81
      %p88 = scmp.eq.s32.totalorder %s20, 1
      %p89 = por %p87, %p88
      %p90 = scmp.ne.s32.totalorder %s82, %s85
      %p91 = scmp.eq.s32.totalorder %s20, 0
      %p92 = por %p90, %p91
      %p93 = scmp.ne.s32.totalorder %s82, %s85
      %p94 = scmp.eq.s32.totalorder %s25, 1
      %p95 = por %p93, %p94
      %p96 = scmp.ne.s32.totalorder %s85, %s86
      %p97 = scmp.eq.s32.totalorder %s25, 0
      %p98 = por %p96, %p97
      %p99 = scmp.ne.s32.totalorder %s85, %s86
      %p100 = scmp.eq.s32.totalorder %s26, 1
      %p101 = por %p99, %p100
      %p103 = scmp.ne.s32.totalorder %s86, %s102
      %p104 = scmp.eq.s32.totalorder %s26, 0
      %p105 = por %p103, %p104
      %s106 = ssub.s32 %s20, %s27
      %p107 = scmp.eq.s32.totalorder %s106, 0
      %s109 = sadd.s32 %s108, 1
      %s110 = scalar_select %p107, %s108, %s109
      %p113 = pneg %p107
      %p114 = scmp.eq.s32.totalorder %s20, 1
      %p115 = por %p113, %p114
      %p116 = scmp.ne.s32.totalorder %s108, %s111
      %p117 = scmp.eq.s32.totalorder %s20, 0
      %p118 = por %p116, %p117
      %p119 = scmp.ne.s32.totalorder %s108, %s111
      %p120 = scmp.eq.s32.totalorder %s25, 1
      %p121 = por %p119, %p120
      %p122 = scmp.ne.s32.totalorder %s111, %s112
      %p123 = scmp.eq.s32.totalorder %s25, 0
      %p124 = por %p122, %p123
      %p125 = scmp.ne.s32.totalorder %s111, %s112
      %p126 = scmp.eq.s32.totalorder %s26, 1
      %p127 = por %p125, %p126
      %p129 = scmp.ne.s32.totalorder %s112, %s128
      %p130 = scmp.eq.s32.totalorder %s26, 0
      %p131 = por %p129, %p130
      %s132 = ssub.s32 %s20, %s27
      %p133 = scmp.eq.s32.totalorder %s132, 0
      %s135 = sadd.s32 %s134, 1
      %s136 = scalar_select %p133, %s134, %s135
      %p139 = pneg %p133
      %p140 = scmp.eq.s32.totalorder %s20, 1
      %p141 = por %p139, %p140
      %p142 = scmp.ne.s32.totalorder %s134, %s137
      %p143 = scmp.eq.s32.totalorder %s20, 0
      %p144 = por %p142, %p143
      %p145 = scmp.ne.s32.totalorder %s134, %s137
      %p146 = scmp.eq.s32.totalorder %s25, 1
      %p147 = por %p145, %p146
      %p148 = scmp.ne.s32.totalorder %s137, %s138
      %p149 = scmp.eq.s32.totalorder %s25, 0
      %p150 = por %p148, %p149
      %p151 = scmp.ne.s32.totalorder %s137, %s138
      %p152 = scmp.eq.s32.totalorder %s26, 1
      %p153 = por %p151, %p152
      %p155 = scmp.ne.s32.totalorder %s138, %s154
      %p156 = scmp.eq.s32.totalorder %s26, 0
      %p157 = por %p155, %p156
      %s158 = ssub.s32 %s20, %s27
      %p159 = scmp.eq.s32.totalorder %s158, 0
      %s161 = sadd.s32 %s160, 1
      %s162 = scalar_select %p159, %s160, %s161
      %p165 = pneg %p159
      %p166 = scmp.eq.s32.totalorder %s20, 1
      %p167 = por %p165, %p166
      %p168 = scmp.ne.s32.totalorder %s160, %s163
      %p169 = scmp.eq.s32.totalorder %s20, 0
      %p170 = por %p168, %p169
      %p171 = scmp.ne.s32.totalorder %s160, %s163
      %p172 = scmp.eq.s32.totalorder %s25, 1
      %p173 = por %p171, %p172
      %p174 = scmp.ne.s32.totalorder %s163, %s164
      %p175 = scmp.eq.s32.totalorder %s25, 0
      %p176 = por %p174, %p175
      %p177 = scmp.ne.s32.totalorder %s163, %s164
      %p178 = scmp.eq.s32.totalorder %s26, 1
      %p179 = por %p177, %p178
      %p181 = scmp.ne.s32.totalorder %s164, %s180
      %p182 = scmp.eq.s32.totalorder %s26, 0
      %p183 = por %p181, %p182
      %p184 = scmp.le.s32.totalorder 1, %s20
      %p185 = scmp.lt.s32.totalorder %s20, 3
      %p186 = pnand %p184, %p185
      %p187 = pneg %p186
      // Predicated region
      $region9: #{tpu_custom_call.1} parent=5 // pred_check
        _
      $region10: #{tpu_custom_call.1} parent=5 // pred_check_branch
        %189 = sbr.rel (%p186) target = $region12
      $region11: #{tpu_custom_call.1} parent=5 // pred_region
        %s190 = ssub.s32 %s20, 1
      $region12: #{tpu_custom_call.1} parent=5 // pred_fallthru
        _
      %p191 = scmp.lt.s32.totalorder %s20, 2
      // Predicated region
      $region13: #{tpu_custom_call.1} parent=5 // pred_check
        %p192 = pneg %p191
      $region14: #{tpu_custom_call.1} parent=5 // pred_check_branch
        %194 = sbr.rel (%p192) target = $region16
      $region15: #{tpu_custom_call.1} parent=5 // pred_region
        // Predicated region
        $region17: #{tpu_custom_call.1} parent=15 // pred_check
          %p195 = pneg %p40
        $region18: #{tpu_custom_call.1} parent=15 // pred_check_branch
          %197 = sbr.rel (%p195) target = $region20
        $region19: #{tpu_custom_call.1} parent=15 // pred_region
          %p198 = scmp.lt.s32.totalorder %s20, 1
          %s199 = scalar_select %p198, %s20, 1
          %s200 = smul.addr %s199, 8
          %s201 = scalar_lea.vmem %s0, %s200
        $region20: #{tpu_custom_call.1} parent=15 // pred_fallthru
          _
        // Predicated region
        $region21: #{tpu_custom_call.1} parent=15 // pred_check
          %p202 = pneg %p66
        $region22: #{tpu_custom_call.1} parent=15 // pred_check_branch
          %204 = sbr.rel (%p202) target = $region24
        $region23: #{tpu_custom_call.1} parent=15 // pred_region
          %p205 = scmp.lt.s32.totalorder %s20, 1
          %s206 = scalar_select %p205, %s20, 1
          %s207 = smul.addr %s206, 8
          %s208 = scalar_lea.vmem %s1, %s207
        $region24: #{tpu_custom_call.1} parent=15 // pred_fallthru
          _
        // Predicated region
        $region25: #{tpu_custom_call.1} parent=15 // pred_check
          %p209 = pneg %p92
        $region26: #{tpu_custom_call.1} parent=15 // pred_check_branch
          %211 = sbr.rel (%p209) target = $region28
        $region27: #{tpu_custom_call.1} parent=15 // pred_region
          %s212 = sand.u32 %s82, 1
          %s213 = scalar_lea.sflag [#allocation3], %s212
          %s214 = sand.u32 %s82, 1
          %s215 = smul.addr %s214, 8
          %s216 = scalar_lea.vmem [#allocation2], %s215
          %s218 = ssub.s32 128, 128
          %219 = vsyncadd %s213, %s218
          %s220 = smul.addr %s20, 128
          %s221 = scalar_lea.hbm %s2, %s220
          %s223 = sshll.u32 %s216, 4
          %s224 = int_to_ptr.vmem [resolvable:$true] %s223
          %226 = dma.hbm_to_vmem [thread:$0]  %s221, 128, %s224, %s213
        $region28: #{tpu_custom_call.1} parent=15 // pred_fallthru
          _
        // Predicated region
        $region29: #{tpu_custom_call.1} parent=15 // pred_check
          %p227 = pneg %p118
        $region30: #{tpu_custom_call.1} parent=15 // pred_check_branch
          %229 = sbr.rel (%p227) target = $region32
        $region31: #{tpu_custom_call.1} parent=15 // pred_region
          %s230 = sand.u32 %s20, 1
          %s231 = scalar_lea.sflag [#allocation6], %s230
          %s232 = sand.u32 %s108, 1
          %s233 = smul.addr %s232, 8
          %s234 = scalar_lea.vmem [#allocation5], %s233
          %s236 = ssub.s32 128, 128
          %237 = vsyncadd %s231, %s236
          %s238 = smul.addr %s20, 128
          %s239 = scalar_lea.hbm %s3, %s238
          %s241 = sshll.u32 %s234, 4
          %s242 = int_to_ptr.vmem [resolvable:$true] %s241
          %244 = dma.hbm_to_vmem [thread:$0]  %s239, 128, %s242, %s231
        $region32: #{tpu_custom_call.1} parent=15 // pred_fallthru
          _
        // Predicated region
        $region33: #{tpu_custom_call.1} parent=15 // pred_check
          %p245 = pneg %p144
        $region34: #{tpu_custom_call.1} parent=15 // pred_check_branch
          %247 = sbr.rel (%p245) target = $region36
        $region35: #{tpu_custom_call.1} parent=15 // pred_region
          %s248 = sand.u32 %s20, 1
          %s249 = scalar_lea.sflag [#allocation6], %s248
          %s250 = sand.u32 %s134, 1
          %s251 = smul.addr %s250, 8
          %s252 = scalar_lea.vmem [#allocation7], %s251
          %s254 = ssub.s32 128, 128
          %255 = vsyncadd %s249, %s254
          %s256 = smul.addr %s20, 128
          %s257 = scalar_lea.hbm %s4, %s256
          %s259 = sshll.u32 %s252, 4
          %s260 = int_to_ptr.vmem [resolvable:$true] %s259
          %262 = dma.hbm_to_vmem [thread:$0]  %s257, 128, %s260, %s249
        $region36: #{tpu_custom_call.1} parent=15 // pred_fallthru
          _
      $region16: #{tpu_custom_call.1} parent=5 // pred_fallthru
        _
      %p263 = scmp.le.s32.totalorder 1, %s20
      %p264 = scmp.lt.s32.totalorder %s20, 3
      %p265 = pnand %p263, %p264
      %p266 = pneg %p265
      // Predicated region
      $region37: #{tpu_custom_call.1} parent=5 // pred_check
        _
      $region38: #{tpu_custom_call.1} parent=5 // pred_check_branch
        %268 = sbr.rel (%p265) target = $region40
      $region39: #{tpu_custom_call.1} parent=5 // pred_region
        %s269 = ssub.s32 %s20, 1
        %s270 = sand.u32 %s85, 1
        %s271 = scalar_lea.sflag [#allocation3], %s270
        %s272 = sand.u32 %s85, 1
        %s273 = smul.addr %s272, 8
        %s274 = scalar_lea.vmem [#allocation2], %s273
        // Predicated region
        $region41: #{tpu_custom_call.1} parent=39 // pred_check
          %p275 = pneg %p98
        $region42: #{tpu_custom_call.1} parent=39 // pred_check_branch
          %277 = sbr.rel (%p275) target = $region44
        $region43: #{tpu_custom_call.1} parent=39 // pred_region
          %278 = dma.done %s271, 128
        $region44: #{tpu_custom_call.1} parent=39 // pred_fallthru
          _
        %s279 = sand.u32 %s25, 1
        %s280 = scalar_lea.sflag [#allocation6], %s279
        %s281 = sand.u32 %s111, 1
        %s282 = smul.addr %s281, 8
        %s283 = scalar_lea.vmem [#allocation5], %s282
        // Predicated region
        $region45: #{tpu_custom_call.1} parent=39 // pred_check
          %p284 = pneg %p124
        $region46: #{tpu_custom_call.1} parent=39 // pred_check_branch
          %286 = sbr.rel (%p284) target = $region48
        $region47: #{tpu_custom_call.1} parent=39 // pred_region
          %287 = dma.done %s280, 128
        $region48: #{tpu_custom_call.1} parent=39 // pred_fallthru
          _
        %s288 = sand.u32 %s25, 1
        %s289 = scalar_lea.sflag [#allocation6], %s288
        %s290 = sand.u32 %s137, 1
        %s291 = smul.addr %s290, 8
        %s292 = scalar_lea.vmem [#allocation7], %s291
        // Predicated region
        $region49: #{tpu_custom_call.1} parent=39 // pred_check
          %p293 = pneg %p150
        $region50: #{tpu_custom_call.1} parent=39 // pred_check_branch
          %295 = sbr.rel (%p293) target = $region52
        $region51: #{tpu_custom_call.1} parent=39 // pred_region
          %296 = dma.done %s289, 128
        $region52: #{tpu_custom_call.1} parent=39 // pred_fallthru
          _
        %p297 = scmp.lt.s32.totalorder %s25, 1
        %s298 = scalar_select %p297, %s25, 1
        %s299 = smul.addr %s298, 8
        %s300 = scalar_lea.vmem %s0, %s299
        %p301 = pneg %p46
        %p302 = pneg %p43
        %p303 = scmp.lt.s32.totalorder %s25, 1
        %s304 = scalar_select %p303, %s25, 1
        %s305 = smul.addr %s304, 8
        %s306 = scalar_lea.vmem %s1, %s305
        %p307 = pneg %p72
        %p308 = pneg %p69
        %s309 = sand.u32 %s85, 1
        %s310 = scalar_lea.sflag [#allocation3], %s309
        %s311 = sand.u32 %s85, 1
        %s312 = smul.addr %s311, 8
        %s313 = scalar_lea.vmem [#allocation2], %s312
        %p314 = pneg %p98
        %p315 = pneg %p95
        %s316 = sand.u32 %s25, 1
        %s317 = scalar_lea.sflag [#allocation6], %s316
        %s318 = sand.u32 %s111, 1
        %s319 = smul.addr %s318, 8
        %s320 = scalar_lea.vmem [#allocation5], %s319
        %p321 = pneg %p124
        %p322 = pneg %p121
        %s323 = sand.u32 %s25, 1
        %s324 = scalar_lea.sflag [#allocation6], %s323
        %s325 = sand.u32 %s137, 1
        %s326 = smul.addr %s325, 8
        %s327 = scalar_lea.vmem [#allocation7], %s326
        %p328 = pneg %p150
        %p329 = pneg %p147
        %p330 = pneg %p176
        %p331 = pneg %p173
        %s332 = sand.u32 %s163, 1
        %s333 = scalar_lea.sflag [#allocation4], %s332
        %s334 = sand.u32 %s163, 1
        %s335 = smul.addr %s334, 8
        %s336 = scalar_lea.vmem [#allocation8], %s335
        %p337 = scmp.lt.s32.totalorder %s25, 1
        %s338 = scalar_select %p337, %s25, 1
        %s339 = smul.addr %s338, 8
        %s340 = scalar_lea.vmem %s0, %s339
        %p341 = scmp.lt.s32.totalorder %s25, 1
        %s342 = scalar_select %p341, %s25, 1
        %s343 = smul.addr %s342, 8
        %s344 = scalar_lea.vmem %s1, %s343
        %v345 = vld [vmem:[%s340] sm:$0xff]
        %v346 = vld [vmem:[%s344] sm:$0xff]
        %v347 = vadd.f32 %v346, 1e-06
        %348 = vmax.xlane.f32.xlu0 %v347
        %v349 = vpop.xlane.xlu0 %348
        %v350 = vsub.f32 %v347, %v349
        %v351 = vmul.f32 %v350, 1.442695
        %v352 = vpow.pop %v351
        %353 = vadd.xlane.f32.xlu0 %v352
        %v354 = vpop.xlane.xlu0 %353
        %v355 = vlog2.pop %v354
        %v356 = vmul.f32 %v355, 0.6931472
        %v357 = vsub.f32 %v350, %v356
        %v358 = vlaneseq
        %v359 = vand.u32 %v358, 127
        %360 = vset.pattern.permute.xlu0 0
        %361 = vperm.xlu0 %360, %v345
        %v362 = vpop.permute.xlu0 %361
        %vm363 = vcmp.eq.s32.totalorder %v359, %v362
        %v364 = vsel %vm363, %v357, 0.0
        %365 = vadd.xlane.f32.xlu0 %v364
        %v366 = vpop.xlane.xlu0 %365
        %vm367 = vcmask 7168
        %v368 = vsel %vm367, %v366, 0.0
        %369 = vadd.xlane.f32.xlu0 %v368
        %v370 = vpop.xlane.xlu0 %369
        %v371 = vrot.slane %v370, 4
        %v372 = vadd.f32 %v370, %v371
        %v373 = vrot.slane %v372, 2
        %v374 = vadd.f32 %v372, %v373
        %v375 = vrot.slane %v374, 1
        %v376 = vadd.f32 %v374, %v375
        %s377 = vtos %v376
        %s378 = ssub.f32 0.0, %s377
        %v379 = vld [vmem:[%s274] sm:$0xff]
        %v380 = vadd.f32 %v379, 1e-06
        %381 = vmax.xlane.f32.xlu0 %v380
        %v382 = vpop.xlane.xlu0 %381
        %v383 = vsub.f32 %v380, %v382
        %v384 = vmul.f32 %v383, 1.442695
        %v385 = vpow.pop %v384
        %386 = vadd.xlane.f32.xlu0 %v385
        %v387 = vpop.xlane.xlu0 %386
        %v388 = vlog2.pop %v387
        %v389 = vmul.f32 %v388, 0.6931472
        %v390 = vsub.f32 %v383, %v389
        %v391 = vsel %vm363, %v390, 0.0
        %392 = vadd.xlane.f32.xlu0 %v391
        %v393 = vpop.xlane.xlu0 %392
        %v394 = vsel %vm367, %v393, 0.0
        %395 = vadd.xlane.f32.xlu0 %v394
        %v396 = vpop.xlane.xlu0 %395
        %v397 = vrot.slane %v396, 4
        %v398 = vadd.f32 %v396, %v397
        %v399 = vrot.slane %v398, 2
        %v400 = vadd.f32 %v398, %v399
        %v401 = vrot.slane %v400, 1
        %v402 = vadd.f32 %v400, %v401
        %s403 = vtos %v402
        %s404 = ssub.f32 0.0, %s403
        %v405 = vld [vmem:[%s292] sm:$0xff]
        %406 = vmax.xlane.f32.xlu0 %v405
        %v407 = vpop.xlane.xlu0 %406
        %v408 = vsub.f32 %v405, %v407
        %v409 = vmul.f32 %v408, 1.442695
        %v410 = vpow.pop %v409
        %411 = vadd.xlane.f32.xlu0 %v410
        %v412 = vpop.xlane.xlu0 %411
        %v413 = vrcp.pop %v412
        %v414 = vmul.f32 %v410, %v413
        %v415 = vlog2.pop %v412
        %v416 = vmul.f32 %v415, 0.6931472
        %v417 = vsub.f32 %v408, %v416
        %v418 = vld [vmem:[%s283] sm:$0xff]
        %419 = vmax.xlane.f32.xlu0 %v418
        %v420 = vpop.xlane.xlu0 %419
        %v421 = vsub.f32 %v418, %v420
        %v422 = vmul.f32 %v421, 1.442695
        %v423 = vpow.pop %v422
        %424 = vadd.xlane.f32.xlu0 %v423
        %v425 = vpop.xlane.xlu0 %424
        %v426 = vlog2.pop %v425
        %v427 = vmul.f32 %v426, 0.6931472
        %v428 = vsub.f32 %v421, %v427
        %v429 = vsub.f32 %v417, %v428
        %v430 = vmul.f32 %v414, %v429
        %431 = vadd.xlane.f32.xlu0 %v430
        %v432 = vpop.xlane.xlu0 %431
        %v433 = vrot.slane %v432, 4
        %v434 = vadd.f32 %v432, %v433
        %v435 = vrot.slane %v434, 2
        %v436 = vadd.f32 %v434, %v435
        %v437 = vrot.slane %v436, 1
        %v438 = vadd.f32 %v436, %v437
        %s439 = vtos %v438
        %vm440 = vcmp.eq.s32.totalorder %v359, 0
        %v441 = vstv %s378
        %v442 = vsel %vm440, %v441, 0.0
        %vm443 = vcmp.eq.s32.totalorder %v359, 1
        %v444 = vstv %s404
        %v445 = vsel %vm443, %v444, 0.0
        %v446 = vadd.f32 %v442, %v445
        %vm447 = vcmp.eq.s32.totalorder %v359, 2
        %v448 = vstv %s439
        %v449 = vsel %vm447, %v448, 0.0
        %v450 = vadd.f32 %v446, %v449
        %451 = vst [vmem:[%s336] sm:$0xff] %v450
        %s452 = sand.u32 %s163, 1
        %s453 = scalar_lea.sflag [#allocation4], %s452
        %s454 = sand.u32 %s163, 1
        %s455 = smul.addr %s454, 8
        %s456 = scalar_lea.vmem [#allocation8], %s455
        // Predicated region
        $region53: #{tpu_custom_call.1} parent=39 // pred_check
          %p457 = pneg %p173
        $region54: #{tpu_custom_call.1} parent=39 // pred_check_branch
          %459 = sbr.rel (%p457) target = $region56
        $region55: #{tpu_custom_call.1} parent=39 // pred_region
          %s461 = ssub.s32 128, 128
          %462 = vsyncadd %s453, %s461
          %s463 = smul.addr %s25, 128
          %s464 = scalar_lea.hbm %s5, %s463
          %s466 = sshll.u32 %s456, 4
          %s467 = int_to_ptr.vmem [resolvable:$true] %s466
          %469 = dma.vmem_to_hbm [thread:$0]  %s467, 128, %s464, %s453
        $region56: #{tpu_custom_call.1} parent=39 // pred_fallthru
          _
      $region40: #{tpu_custom_call.1} parent=5 // pred_fallthru
        _
      %p470 = scmp.le.s32.totalorder 2, %s20
      // Predicated region
      $region57: #{tpu_custom_call.1} parent=5 // pred_check
        %p471 = pneg %p470
      $region58: #{tpu_custom_call.1} parent=5 // pred_check_branch
        %473 = sbr.rel (%p471) target = $region60
      $region59: #{tpu_custom_call.1} parent=5 // pred_region
        %s474 = ssub.s32 %s20, 2
        // Predicated region
        $region61: #{tpu_custom_call.1} parent=59 // pred_check
          %p475 = pneg %p179
        $region62: #{tpu_custom_call.1} parent=59 // pred_check_branch
          %477 = sbr.rel (%p475) target = $region64
        $region63: #{tpu_custom_call.1} parent=59 // pred_region
          %s478 = sand.u32 %s164, 1
          %s479 = scalar_lea.sflag [#allocation4], %s478
          %s480 = sand.u32 %s164, 1
          %s481 = smul.addr %s480, 8
          %s482 = scalar_lea.vmem [#allocation8], %s481
          %483 = dma.done %s479, 128
        $region64: #{tpu_custom_call.1} parent=59 // pred_fallthru
          _
      $region60: #{tpu_custom_call.1} parent=5 // pred_fallthru
        _
    $region6: #{tpu_custom_call.1} parent=1 // loop_footer
      %s24 = sadd.s32 1, %s20
    $region7: #{tpu_custom_call.1} parent=1 // loop_footer_branch
      %19 = sbr.rel target = $region3
    $region8: #{tpu_custom_call.1} parent=1 // loop_exit
      _
    %484 = vsyncpa [#allocation3], 1
    %s485 = scalar_lea.sflag [#allocation3], 1
    %486 = vsyncpa %s485, 1
    %487 = vsyncpa [#allocation6], 1
    %s488 = scalar_lea.sflag [#allocation6], 1
    %489 = vsyncpa %s488, 1
    %490 = vsyncpa [#allocation4], 1
    %s491 = scalar_lea.sflag [#allocation4], 1
    %492 = vsyncpa %s491, 1

</llo_original>
